<compile_context>
chip_gen: v7x
topology: tpu7x:2x2x1
jax: 0.10.0
libtpu: 0.0.40
codegen_flags: <defaults>
</compile_context>

<pallas_src>
import jax
import jax.numpy as jnp
from jax import lax
from jax.experimental import pallas as pl
from jax.experimental.pallas import tpu as pltpu

TEMP = 0.07  # MoCo temperature


def _vmem_budget_bytes():
    """Physical VMEM per core; conservative fallback if the query fails."""
    try:
        cap = int(getattr(pltpu.get_tpu_info(), "vmem_capacity_bytes", 0) or 0)
    except Exception:
        cap = 0
    if cap <= 0:
        cap = 64 * 1024 * 1024          # v7x-sized: safe on every generation
    return cap


# ---------------------------------------------------------------------------
# Kernel 1: linear query/key encoders + L2-normalize + l_pos, tiled over D.
# grid = (D // block_d,)  -- reduction axis ("arbitrary").
# Outputs: q in bf16 (for the MXU in kernel 2) and l_pos = (q.k)/T in f32.
# f32 accumulators live in VMEM scratch (k never goes back to HBM).
# ---------------------------------------------------------------------------
def _encoder_kernel(xq_ref, wq_ref, bq_ref, xk_ref, wk_ref, bk_ref,
                    qbf_ref, lpos_ref, accq_ref, acck_ref):
    d = pl.program_id(0)

    @pl.when(d == 0)
    def _init():
        accq_ref[...] = jnp.zeros_like(accq_ref)
        acck_ref[...] = jnp.zeros_like(acck_ref)

    # bf16 MXU operands (cast in-kernel; inputs stay f32 in HBM), f32 accumulate.
    accq_ref[...] += jnp.dot(xq_ref[...].astype(jnp.bfloat16),
                             wq_ref[...].astype(jnp.bfloat16),
                             preferred_element_type=jnp.float32)
    acck_ref[...] += jnp.dot(xk_ref[...].astype(jnp.bfloat16),
                             wk_ref[...].astype(jnp.bfloat16),
                             preferred_element_type=jnp.float32)

    @pl.when(d == pl.num_programs(0) - 1)
    def _finalize():
        zq = accq_ref[...] + bq_ref[...]
        q = zq * lax.rsqrt(jnp.sum(zq * zq, axis=-1, keepdims=True))
        zk = acck_ref[...] + bk_ref[...]
        k = zk * lax.rsqrt(jnp.sum(zk * zk, axis=-1, keepdims=True))
        qbf_ref[...] = q.astype(jnp.bfloat16)
        lpos_ref[...] = (jnp.sum(q * k, axis=-1, keepdims=True)
                         * jnp.float32(1.0 / TEMP))


# ---------------------------------------------------------------------------
# Kernel 2: contrastive logits + per-row CE(target=0) term, tiled over the
# queue dim K with an online logsumexp.
# grid = (N // block_n, K // block_k + 1)  -- ("parallel", "arbitrary").
# The logits output is the full (N, 1+K) torch-shaped array: each l_neg tile
# is rolled right by one lane, the spilled last column is carried in scratch
# to the next tile, and l_pos lands in column 0 of tile 0.  The extra final
# grid step flushes the last carried column into the partial last block.
# Per-row loss terms go to a tiny (N, 1) output (mean taken outside).
# ---------------------------------------------------------------------------
def _contrastive_kernel(qbf_ref, lpos_ref, queue_ref,
                        logits_ref, loss_ref,
                        m_sc, s_sc, carry_sc):
    j = pl.program_id(1)
    nk = pl.num_programs(1) - 1          # number of real queue tiles
    inv_t = jnp.float32(1.0 / TEMP)

    @pl.when(j == 0)
    def _init():
        lp = lpos_ref[...]                # (bn, 1), already divided by T
        m_sc[...] = lp                    # running max
        s_sc[...] = jnp.ones_like(s_sc)   # exp(l_pos - m) == 1
        carry_sc[...] = lp                # column carried into lane 0 of tile 0

    @pl.when(j < nk)
    def _compute():
        l_neg = jnp.dot(qbf_ref[...], queue_ref[...].astype(jnp.bfloat16),
                        preferred_element_type=jnp.float32) * inv_t
        # Shift right by one lane (XLU), put the carried column in lane 0.
        rolled = pltpu.roll(l_neg, shift=1, axis=1)
        lane = lax.broadcasted_iota(jnp.int32, l_neg.shape, 1)
        logits_ref[...] = jnp.where(lane == 0, carry_sc[...], rolled
                                    ).astype(logits_ref.dtype)
        carry_sc[...] = l_neg[:, -1:]     # spilled last column -> next tile

        # Online logsumexp update (f32).
        m_prev = m_sc[...]
        m_new = jnp.maximum(m_prev, jnp.max(l_neg, axis=-1, keepdims=True))
        s_sc[...] = (s_sc[...] * jnp.exp(m_prev - m_new)
                     + jnp.sum(jnp.exp(l_neg - m_new), axis=-1, keepdims=True))
        m_sc[...] = m_new

    @pl.when(j == nk)
    def _flush():
        # Last (partial) output block: only its first column is in-bounds and
        # receives the carried final negative; the rest is masked on writeback.
        logits_ref[...] = jnp.broadcast_to(
            carry_sc[...], logits_ref.shape).astype(logits_ref.dtype)
        # Per-row CE term: logsumexp(logits_row) - l_pos_row.
        loss_ref[...] = m_sc[...] + jnp.log(s_sc[...]) - lpos_ref[...]


# ---------------------------------------------------------------------------
# Wrapper: Pallas-backed FullModel.forward -> (loss[1], outputs[N, 1+K])
# ---------------------------------------------------------------------------
def full_model_forward(x_q, x_k, params, *, block_d=2048, block_k=None,
                       block_n=None):
    n = x_q.shape[0]
    d = x_q.shape[1] * x_q.shape[2] * x_q.shape[3]
    f = params["wq"].shape[1]
    kq = params["queue"].shape[1]

    vmem_cap = _vmem_budget_bytes()
    vmem_limit = min(vmem_cap * 3 // 4, 96 * 1024 * 1024)
    if block_k is None:
        # Bigger lane-dense queue/logits tiles on 128-MiB-VMEM chips (v5e/v6e);
        # stay at 2048 on v7x's 64 MiB.
        block_k = 4096 if vmem_cap > 96 * 1024 * 1024 else 2048
    if block_n is None:
        block_n = n       # single row block: no duplicated queue reads

    block_d = min(block_d, d)
    block_k = min(block_k, kq)

    # (8, 128) tiling constraints (N multiple of 16 is preferable for bf16).
    assert n % 8 == 0, "batch must be a multiple of 8 (sublane alignment)"
    assert n % block_n == 0 and block_n % 8 == 0
    assert d % block_d == 0 and block_d % 128 == 0
    assert kq % block_k == 0 and block_k % 128 == 0
    assert f % 128 == 0

    xq_flat = x_q.reshape(n, d)        # torch .view(N, -1); stays f32 in HBM
    xk_flat = x_k.reshape(n, d)

    enc_cparams = pltpu.CompilerParams(
        dimension_semantics=("arbitrary",),            # D is a reduction
        vmem_limit_bytes=vmem_limit)
    con_cparams = pltpu.CompilerParams(
        dimension_semantics=("parallel", "arbitrary"),  # rows x K-reduction
        vmem_limit_bytes=vmem_limit)

    # ---- encoders: q_bf16, l_pos = head(x_q, x_k); D-tiled reduction ----
    q_bf16, l_pos = pl.pallas_call(
        _encoder_kernel,
        out_shape=(jax.ShapeDtypeStruct((n, f), jnp.bfloat16),
                   jax.ShapeDtypeStruct((n, 1), jnp.float32)),
        grid_spec=pltpu.PrefetchScalarGridSpec(
            num_scalar_prefetch=0,
            grid=(d // block_d,),
            in_specs=[
                pl.BlockSpec((n, block_d), lambda i: (0, i)),   # xq tile
                pl.BlockSpec((block_d, f), lambda i: (i, 0)),   # wq tile
                pl.BlockSpec((1, f), lambda i: (0, 0)),         # bq
                pl.BlockSpec((n, block_d), lambda i: (0, i)),   # xk tile
                pl.BlockSpec((block_d, f), lambda i: (i, 0)),   # wk tile
                pl.BlockSpec((1, f), lambda i: (0, 0)),         # bk
            ],
            out_specs=[
                pl.BlockSpec((n, f), lambda i: (0, 0)),
                pl.BlockSpec((n, 1), lambda i: (0, 0)),
            ],
            scratch_shapes=[pltpu.VMEM((n, f), jnp.float32),
                            pltpu.VMEM((n, f), jnp.float32)],
        ),
        compiler_params=enc_cparams,
    )(xq_flat, params["wq"], params["bq"], xk_flat, params["wk"], params["bk"])

    # ---- contrastive logits (N, 1+K) + per-row CE terms, K-tiled ----
    nk = kq // block_k
    logits, per_row = pl.pallas_call(
        _contrastive_kernel,
        out_shape=(jax.ShapeDtypeStruct((n, 1 + kq), jnp.float32),
                   jax.ShapeDtypeStruct((n, 1), jnp.float32)),
        grid_spec=pltpu.PrefetchScalarGridSpec(
            num_scalar_prefetch=0,
            grid=(n // block_n, nk + 1),                 # +1: flush partial block
            in_specs=[
                pl.BlockSpec((block_n, f), lambda i, j: (i, 0)),   # q (resident)
                pl.BlockSpec((block_n, 1), lambda i, j: (i, 0)),   # l_pos
                pl.BlockSpec((f, block_k),
                             lambda i, j: (0, jnp.minimum(j, nk - 1))),  # queue
            ],
            out_specs=[
                pl.BlockSpec((block_n, block_k), lambda i, j: (i, j)),  # logits
                pl.BlockSpec((block_n, 1), lambda i, j: (i, 0)),        # CE terms
            ],
            scratch_shapes=[pltpu.VMEM((block_n, 1), jnp.float32),  # running max
                            pltpu.VMEM((block_n, 1), jnp.float32),  # running sum
                            pltpu.VMEM((block_n, 1), jnp.float32)], # carry column
        ),
        compiler_params=con_cparams,
    )(q_bf16, l_pos, params["queue"])

    # Mean over N scalars only (negligible); torch.unsqueeze(loss, 0).
    loss = jnp.mean(per_row).reshape(1)
    return loss, logits


# ---------------------------------------------------------------------------
# Pure-JAX reference mirroring the kernel's bf16-MXU / f32-accumulate math.
# ---------------------------------------------------------------------------
def _reference_forward(x_q, x_k, params):
    n = x_q.shape[0]
    xq = x_q.reshape(n, -1).astype(jnp.bfloat16)
    xk = x_k.reshape(n, -1).astype(jnp.bfloat16)
    wq = params["wq"].astype(jnp.bfloat16)
    wk = params["wk"].astype(jnp.bfloat16)
    queue = params["queue"].astype(jnp.bfloat16)

    zq = jnp.dot(xq, wq, preferred_element_type=jnp.float32) + params["bq"]
    q = zq / jnp.linalg.norm(zq, axis=-1, keepdims=True)
    zk = jnp.dot(xk, wk, preferred_element_type=jnp.float32) + params["bk"]
    k = zk / jnp.linalg.norm(zk, axis=-1, keepdims=True)

    l_pos = jnp.sum(q * k, axis=-1, keepdims=True) / TEMP
    l_neg = jnp.dot(q.astype(jnp.bfloat16), queue,
                    preferred_element_type=jnp.float32) / TEMP
    logits = jnp.concatenate([l_pos, l_neg], axis=1)
    lse = jax.nn.logsumexp(logits, axis=-1)
    loss = jnp.mean(lse - logits[:, 0])
    return loss[None], logits


if __name__ == "__main__":
    # Small deterministic shapes: batch=8, channels=4, spatial=16,
    # flattened dim D=1024, feature dim F=128, queue size K=512.
    N, C, H, W = 8, 4, 16, 16
    D, F, K = C * H * W, 128, 512

    key = jax.random.PRNGKey(0)
    k_xq, k_xk, k_wq, k_bq, k_wk, k_bk, k_queue = jax.random.split(key, 7)

    x_q = jax.random.normal(k_xq, (N, C, H, W), dtype=jnp.float32)
    x_k = jax.random.normal(k_xk, (N, C, H, W), dtype=jnp.float32)

    queue = jax.random.normal(k_queue, (F, K), dtype=jnp.float32)
    queue = queue / jnp.linalg.norm(queue, axis=0, keepdims=True)  # unit keys

    params = {
        "wq": jax.random.normal(k_wq, (D, F), dtype=jnp.float32) * 0.02,
        "bq": jax.random.normal(k_bq, (1, F), dtype=jnp.float32) * 0.01,
        "wk": jax.random.normal(k_wk, (D, F), dtype=jnp.float32) * 0.02,
        "bk": jax.random.normal(k_bk, (1, F), dtype=jnp.float32) * 0.01,
        "queue": queue,
    }

    # Small tiles so both grids actually iterate (D: 4 steps, K: 4 + 1 steps).
    loss, outputs = full_model_forward(x_q, x_k, params,
                                       block_d=256, block_k=128)
    jax.block_until_ready((loss, outputs))

    # Correctness check against the pure-JAX reference (bf16 matmuls => loose tol).
    ref_loss, ref_outputs = _reference_forward(x_q, x_k, params)
    assert loss.shape == (1,)
    assert outputs.shape == (N, 1 + K)
    assert jnp.allclose(loss, ref_loss, rtol=2e-2, atol=2e-2)
    assert jnp.allclose(outputs, ref_outputs, rtol=2e-2, atol=2e-2)

    print("KERNEL_OK")
</pallas_src>

<mosaic_0001>
module attributes {stable_mosaic.version = 11 : i64} {
  func.func @_encoder_kernel(%arg0: i32, %arg1: memref<8x256xf32, #tpu.memory_space<vmem>>, %arg2: memref<256x128xf32, #tpu.memory_space<vmem>>, %arg3: memref<1x128xf32, #tpu.memory_space<vmem>>, %arg4: memref<8x256xf32, #tpu.memory_space<vmem>>, %arg5: memref<256x128xf32, #tpu.memory_space<vmem>>, %arg6: memref<1x128xf32, #tpu.memory_space<vmem>>, %arg7: memref<8x128xbf16, #tpu.memory_space<vmem>>, %arg8: memref<8x1xf32, #tpu.memory_space<vmem>>, %arg9: memref<8x128xf32, #tpu.memory_space<vmem>>, %arg10: memref<8x128xf32, #tpu.memory_space<vmem>>) attributes {dimension_semantics = [#tpu.dimension_semantics<arbitrary>], iteration_bounds = array<i64: 4>, scalar_prefetch = 0 : i64, scratch_operands = 2 : i64, tpu.core_type = #tpu.core_type<tc>, window_params = [{transform_indices = @transform_0, window_bounds = array<i64: 8, 256>}, {transform_indices = @transform_1, window_bounds = array<i64: 256, 128>}, {pipeline_mode = #tpu.pipeline_mode<synchronous>, transform_indices = @transform_2, window_bounds = array<i64: 1, 128>}, {transform_indices = @transform_3, window_bounds = array<i64: 8, 256>}, {transform_indices = @transform_4, window_bounds = array<i64: 256, 128>}, {pipeline_mode = #tpu.pipeline_mode<synchronous>, transform_indices = @transform_5, window_bounds = array<i64: 1, 128>}, {pipeline_mode = #tpu.pipeline_mode<synchronous>, transform_indices = @transform_6, window_bounds = array<i64: 8, 128>}, {pipeline_mode = #tpu.pipeline_mode<synchronous>, transform_indices = @transform_7, window_bounds = array<i64: 8, 1>}]} {
    %c0_i32 = arith.constant 0 : i32
    %0 = arith.cmpi eq, %arg0, %c0_i32 : i32
    %1 = arith.extui %0 : i1 to i32
    %c0_i32_0 = arith.constant 0 : i32
    %2 = arith.cmpi ne, %1, %c0_i32_0 : i32
    scf.if %2 {
      %cst_18 = arith.constant 0.000000e+00 : f32
      %22 = vector.broadcast %cst_18 : f32 to vector<8x128xf32>
      %c0_19 = arith.constant 0 : index
      %c0_20 = arith.constant 0 : index
      %23 = vector.load %arg9[%c0_19, %c0_20] : memref<8x128xf32, #tpu.memory_space<vmem>>, vector<8x128xf32>
      tpu.vector_store %arg9[%c0_19, %c0_20], %22 {strides = array<i32>} : memref<8x128xf32, #tpu.memory_space<vmem>>, vector<8x128xf32>,
      %cst_21 = arith.constant 0.000000e+00 : f32
      %24 = vector.broadcast %cst_21 : f32 to vector<8x128xf32>
      %c0_22 = arith.constant 0 : index
      %c0_23 = arith.constant 0 : index
      %25 = vector.load %arg10[%c0_22, %c0_23] : memref<8x128xf32, #tpu.memory_space<vmem>>, vector<8x128xf32>
      tpu.vector_store %arg10[%c0_22, %c0_23], %24 {strides = array<i32>} : memref<8x128xf32, #tpu.memory_space<vmem>>, vector<8x128xf32>,
    } else {
    }
    %c0 = arith.constant 0 : index
    %c0_1 = arith.constant 0 : index
    %3 = vector.load %arg9[%c0, %c0_1] : memref<8x128xf32, #tpu.memory_space<vmem>>, vector<8x128xf32>
    %c0_2 = arith.constant 0 : index
    %c0_3 = arith.constant 0 : index
    %4 = vector.load %arg1[%c0_2, %c0_3] : memref<8x256xf32, #tpu.memory_space<vmem>>, vector<8x256xf32>
    %5 = arith.truncf %4 : vector<8x256xf32> to vector<8x256xbf16>
    %c0_4 = arith.constant 0 : index
    %c0_5 = arith.constant 0 : index
    %6 = vector.load %arg2[%c0_4, %c0_5] : memref<256x128xf32, #tpu.memory_space<vmem>>, vector<256x128xf32>
    %7 = arith.truncf %6 : vector<256x128xf32> to vector<256x128xbf16>
    %cst = arith.constant dense<0.000000e+00> : vector<8x128xf32>
    %8 = tpu.matmul %5, %7, %cst {dimension_numbers = #tpu.dot_dimension_numbers<[1], [0], [0], [1], [0, 0, 1, 1], [], []>} : vector<8x256xbf16>, vector<256x128xbf16>, vector<8x128xf32> -> vector<8x128xf32>
    %9 = arith.addf %3, %8 : vector<8x128xf32>
    %c0_6 = arith.constant 0 : index
    %c0_7 = arith.constant 0 : index
    %10 = vector.load %arg9[%c0_6, %c0_7] : memref<8x128xf32, #tpu.memory_space<vmem>>, vector<8x128xf32>
    tpu.vector_store %arg9[%c0_6, %c0_7], %9 {strides = array<i32>} : memref<8x128xf32, #tpu.memory_space<vmem>>, vector<8x128xf32>,
    %c0_8 = arith.constant 0 : index
    %c0_9 = arith.constant 0 : index
    %11 = vector.load %arg10[%c0_8, %c0_9] : memref<8x128xf32, #tpu.memory_space<vmem>>, vector<8x128xf32>
    %c0_10 = arith.constant 0 : index
    %c0_11 = arith.constant 0 : index
    %12 = vector.load %arg4[%c0_10, %c0_11] : memref<8x256xf32, #tpu.memory_space<vmem>>, vector<8x256xf32>
    %13 = arith.truncf %12 : vector<8x256xf32> to vector<8x256xbf16>
    %c0_12 = arith.constant 0 : index
    %c0_13 = arith.constant 0 : index
    %14 = vector.load %arg5[%c0_12, %c0_13] : memref<256x128xf32, #tpu.memory_space<vmem>>, vector<256x128xf32>
    %15 = arith.truncf %14 : vector<256x128xf32> to vector<256x128xbf16>
    %cst_14 = arith.constant dense<0.000000e+00> : vector<8x128xf32>
    %16 = tpu.matmul %13, %15, %cst_14 {dimension_numbers = #tpu.dot_dimension_numbers<[1], [0], [0], [1], [0, 0, 1, 1], [], []>} : vector<8x256xbf16>, vector<256x128xbf16>, vector<8x128xf32> -> vector<8x128xf32>
    %17 = arith.addf %11, %16 : vector<8x128xf32>
    %c0_15 = arith.constant 0 : index
    %c0_16 = arith.constant 0 : index
    %18 = vector.load %arg10[%c0_15, %c0_16] : memref<8x128xf32, #tpu.memory_space<vmem>>, vector<8x128xf32>
    tpu.vector_store %arg10[%c0_15, %c0_16], %17 {strides = array<i32>} : memref<8x128xf32, #tpu.memory_space<vmem>>, vector<8x128xf32>,
    %c3_i32 = arith.constant 3 : i32
    %19 = arith.cmpi eq, %arg0, %c3_i32 : i32
    %20 = arith.extui %19 : i1 to i32
    %c0_i32_17 = arith.constant 0 : i32
    %21 = arith.cmpi ne, %20, %c0_i32_17 : i32
    scf.if %21 {
      %c0_18 = arith.constant 0 : index
      %c0_19 = arith.constant 0 : index
      %22 = vector.load %arg9[%c0_18, %c0_19] : memref<8x128xf32, #tpu.memory_space<vmem>>, vector<8x128xf32>
      %c0_20 = arith.constant 0 : index
      %c0_21 = arith.constant 0 : index
      %23 = vector.load %arg3[%c0_20, %c0_21] : memref<1x128xf32, #tpu.memory_space<vmem>>, vector<1x128xf32>
      %24 = vector.broadcast %23 : vector<1x128xf32> to vector<8x128xf32>
      %25 = arith.addf %22, %24 : vector<8x128xf32>
      %26 = arith.mulf %25, %25 : vector<8x128xf32>
      %cst_22 = arith.constant dense<0.000000e+00> : vector<8xf32>
      %27 = vector.multi_reduction <add>, %26, %cst_22 [1] : vector<8x128xf32> to vector<8xf32>
      %28 = vector.shape_cast %27 : vector<8xf32> to vector<8x1xf32>
      %29 = math.rsqrt %28 : vector<8x1xf32>
      %30 = vector.broadcast %29 : vector<8x1xf32> to vector<8x128xf32>
      %31 = arith.mulf %25, %30 : vector<8x128xf32>
      %c0_23 = arith.constant 0 : index
      %c0_24 = arith.constant 0 : index
      %32 = vector.load %arg10[%c0_23, %c0_24] : memref<8x128xf32, #tpu.memory_space<vmem>>, vector<8x128xf32>
      %c0_25 = arith.constant 0 : index
      %c0_26 = arith.constant 0 : index
      %33 = vector.load %arg6[%c0_25, %c0_26] : memref<1x128xf32, #tpu.memory_space<vmem>>, vector<1x128xf32>
      %34 = vector.broadcast %33 : vector<1x128xf32> to vector<8x128xf32>
      %35 = arith.addf %32, %34 : vector<8x128xf32>
      %36 = arith.mulf %35, %35 : vector<8x128xf32>
      %cst_27 = arith.constant dense<0.000000e+00> : vector<8xf32>
      %37 = vector.multi_reduction <add>, %36, %cst_27 [1] : vector<8x128xf32> to vector<8xf32>
      %38 = vector.shape_cast %37 : vector<8xf32> to vector<8x1xf32>
      %39 = math.rsqrt %38 : vector<8x1xf32>
      %40 = vector.broadcast %39 : vector<8x1xf32> to vector<8x128xf32>
      %41 = arith.mulf %35, %40 : vector<8x128xf32>
      %42 = arith.truncf %31 : vector<8x128xf32> to vector<8x128xbf16>
      %c0_28 = arith.constant 0 : index
      %c0_29 = arith.constant 0 : index
      %43 = vector.load %arg7[%c0_28, %c0_29] : memref<8x128xbf16, #tpu.memory_space<vmem>>, vector<8x128xbf16>
      tpu.vector_store %arg7[%c0_28, %c0_29], %42 {strides = array<i32>} : memref<8x128xbf16, #tpu.memory_space<vmem>>, vector<8x128xbf16>,
      %44 = arith.mulf %31, %41 : vector<8x128xf32>
      %cst_30 = arith.constant dense<0.000000e+00> : vector<8xf32>
      %45 = vector.multi_reduction <add>, %44, %cst_30 [1] : vector<8x128xf32> to vector<8xf32>
      %46 = vector.shape_cast %45 : vector<8xf32> to vector<8x1xf32>
      %cst_31 = arith.constant 14.2857141 : f32
      %47 = vector.broadcast %cst_31 : f32 to vector<8x1xf32>
      %48 = arith.mulf %46, %47 : vector<8x1xf32>
      %c0_32 = arith.constant 0 : index
      %c0_33 = arith.constant 0 : index
      %49 = vector.load %arg8[%c0_32, %c0_33] : memref<8x1xf32, #tpu.memory_space<vmem>>, vector<8x1xf32>
      tpu.vector_store %arg8[%c0_32, %c0_33], %48 {strides = array<i32>} : memref<8x1xf32, #tpu.memory_space<vmem>>, vector<8x1xf32>,
    } else {
    }
    return
  }
  func.func @transform_0(%arg0: i32) -> (i32, i32) {
    %c0_i32 = arith.constant 0 : i32
    %c0_i32_0 = arith.constant 0 : i32
    return %c0_i32, %arg0 : i32, i32
  }
  func.func @transform_1(%arg0: i32) -> (i32, i32) {
    %c0_i32 = arith.constant 0 : i32
    %c0_i32_0 = arith.constant 0 : i32
    return %arg0, %c0_i32 : i32, i32
  }
  func.func @transform_2(%arg0: i32) -> (i32, i32) {
    %c0_i32 = arith.constant 0 : i32
    %c0_i32_0 = arith.constant 0 : i32
    %c0_i32_1 = arith.constant 0 : i32
    return %c0_i32, %c0_i32_0 : i32, i32
  }
  func.func @transform_3(%arg0: i32) -> (i32, i32) {
    %c0_i32 = arith.constant 0 : i32
    %c0_i32_0 = arith.constant 0 : i32
    return %c0_i32, %arg0 : i32, i32
  }
  func.func @transform_4(%arg0: i32) -> (i32, i32) {
    %c0_i32 = arith.constant 0 : i32
    %c0_i32_0 = arith.constant 0 : i32
    return %arg0, %c0_i32 : i32, i32
  }
  func.func @transform_5(%arg0: i32) -> (i32, i32) {
    %c0_i32 = arith.constant 0 : i32
    %c0_i32_0 = arith.constant 0 : i32
    %c0_i32_1 = arith.constant 0 : i32
    return %c0_i32, %c0_i32_0 : i32, i32
  }
  func.func @transform_6(%arg0: i32) -> (i32, i32) {
    %c0_i32 = arith.constant 0 : i32
    %c0_i32_0 = arith.constant 0 : i32
    %c0_i32_1 = arith.constant 0 : i32
    return %c0_i32, %c0_i32_0 : i32, i32
  }
  func.func @transform_7(%arg0: i32) -> (i32, i32) {
    %c0_i32 = arith.constant 0 : i32
    %c0_i32_0 = arith.constant 0 : i32
    %c0_i32_1 = arith.constant 0 : i32
    return %c0_i32, %c0_i32_0 : i32, i32
  }
}

</mosaic_0001>

<llo_original>
// kernel: tpu_custom_call.1
$region0: #{tpu_custom_call.1}
  #allocation0 [shape = 'u32[]', space=smem, size = 0x4, offset = 0x4, fixed_abs, tag = 'smem constant byte address 0x4 - core index']
  #allocation1 [shape = 'u32[144,128]{1,0:T(1,128)}', space=vmem, size = 0x12000, scoped, tag = 'internal scratch']
  #allocation2 [shape = 'f32[8,128]{1,0:T(8,128)}', space=vmem, size = 0x1000, scoped, tag = 'scratch operand']
  #allocation3 [shape = 'f32[8,128]{1,0:T(8,128)}', space=vmem, size = 0x1000, scoped, tag = 'scratch operand']
  %s0 = inlined_call_operand.hbm [shape: f32[8,1024], index: 0, kind: input, shape index: {}]
  %s1 = inlined_call_operand.hbm [shape: f32[1024,128], index: 1, kind: input, shape index: {}]
  %s2 = inlined_call_operand.vmem [shape: f32[1,128], index: 2, kind: input, shape index: {}]
  %s3 = inlined_call_operand.hbm [shape: f32[8,1024], index: 3, kind: input, shape index: {}]
  %s4 = inlined_call_operand.hbm [shape: f32[1024,128], index: 4, kind: input, shape index: {}]
  %s5 = inlined_call_operand.vmem [shape: f32[1,128], index: 5, kind: input, shape index: {}]
  %s6 = inlined_call_operand.hbm [shape: bf16[8,128], index: 6, kind: output, shape index: {0}]
  %s7 = inlined_call_operand.vmem [shape: f32[8,1], index: 7, kind: output, shape index: {1}]
  %8 = xla_tuple %s6, %s7
  %s9 = sld [smem:[#allocation0]]
  $region89: #{tpu_custom_call.1} parent=0
    _
  %s11 = ssub.s32 1, %s9
  %s12 = scalar_select 0, %s11, %s9
  $region1: #{tpu_custom_call.1} parent=0
    #allocation4 [shape = 'u8[16384]{0}', space=vmem, size = 0x4000, scoped, tag = 'input window, operand 0']
    #allocation5 [shape = 's32[2]{0}', space=sflag, size = 0x8, scoped, tag = 'scoped memory for tpu_custom_call.1']
    #allocation6 [shape = 's32[2]{0}', space=sflag, size = 0x8, scoped, tag = 'scoped memory for tpu_custom_call.1']
    #allocation7 [shape = 'u8[262144]{0}', space=vmem, size = 0x40000, scoped, tag = 'input window, operand 1']
    #allocation8 [shape = 's32[2]{0}', space=sflag, size = 0x8, scoped, tag = 'scoped memory for tpu_custom_call.1']
    #allocation9 [shape = 'u8[16384]{0}', space=vmem, size = 0x4000, scoped, tag = 'input window, operand 3']
    #allocation10 [shape = 'u8[262144]{0}', space=vmem, size = 0x40000, scoped, tag = 'input window, operand 4']
    #allocation11 [shape = 's32[2]{0}', space=sflag, size = 0x8, scoped, tag = 'scoped memory for tpu_custom_call.1']
    #allocation12 [shape = 'u8[2048]{0}', space=vmem, size = 0x800, scoped, tag = 'output window, operand 0, single buffered']
    %13 = vsyncpa [#allocation5], 0
    %s14 = scalar_lea.sflag [#allocation5], 1
    %15 = vsyncpa %s14, 0
    %16 = vsyncpa [#allocation8], 0
    %s17 = scalar_lea.sflag [#allocation8], 1
    %18 = vsyncpa %s17, 0
    %19 = vsyncpa [#allocation11], 0
    %s20 = scalar_lea.sflag [#allocation11], 1
    %21 = vsyncpa %s20, 0
    %22 = vsyncpa [#allocation6], 0
    loop: start=0, step=1, limit=6
    $region2: #{tpu_custom_call.1} parent=1 // loop_pre_header
      _
    $region3: #{tpu_custom_call.1} parent=1 // loop_header
      %s24 = sphi 0, %s28
      %p25 = scmp.ge.s32.totalorder %s24, 6
      %s34 = sphi 0, %s36
      %s37 = sphi 0, %s34
      %s38 = sphi 0, %s37
      %s54 = sphi 0, %s38
      %s60 = sphi 0, %s62
      %s63 = sphi 0, %s60
      %s64 = sphi 0, %s63
      %s80 = sphi 0, %s64
      %s84 = sphi 0, %s84
      %s86 = sphi 0, %s84
      %s87 = sphi 0, %s86
      %s101 = sphi 0, %s87
      %s107 = sphi 0, %s109
      %s110 = sphi 0, %s107
      %s111 = sphi 0, %s110
      %s127 = sphi 0, %s111
      %s133 = sphi 0, %s135
      %s136 = sphi 0, %s133
      %s137 = sphi 0, %s136
      %s153 = sphi 0, %s137
      %s157 = sphi 0, %s157
      %s159 = sphi 0, %s157
      %s160 = sphi 0, %s159
      %s174 = sphi 0, %s160
      %s178 = sphi 0, %s178
      %s180 = sphi 0, %s178
      %s181 = sphi 0, %s180
      %s195 = sphi 0, %s181
      %s199 = sphi 0, %s199
      %s201 = sphi 0, %s199
      %s202 = sphi 0, %s201
      %s216 = sphi 0, %s202
    $region4: #{tpu_custom_call.1} parent=1 // loop_header_branch
      %27 = sbr.rel (%p25) target = $region8
    $region5: #{tpu_custom_call.1} parent=1 // loop_body
      %s29 = ssub.s32 %s24, 1
      %s30 = ssub.s32 %s24, 2
      %s31 = sadd.s32 %s24, 1
      %s32 = ssub.s32 %s24, %s31
      %p33 = scmp.eq.s32.totalorder %s32, 0
      %s35 = sadd.s32 %s34, 1
      %s36 = scalar_select %p33, %s34, %s35
      %p39 = pneg %p33
      %p40 = scmp.eq.s32.totalorder %s24, 3
      %p41 = por %p39, %p40
      %p42 = scmp.ne.s32.totalorder %s34, %s37
      %p43 = scmp.eq.s32.totalorder %s24, 0
      %p44 = por %p42, %p43
      %p45 = scmp.ne.s32.totalorder %s34, %s37
      %p46 = scmp.eq.s32.totalorder %s29, 3
      %p47 = por %p45, %p46
      %p48 = scmp.ne.s32.totalorder %s37, %s38
      %p49 = scmp.eq.s32.totalorder %s29, 0
      %p50 = por %p48, %p49
      %p51 = scmp.ne.s32.totalorder %s37, %s38
      %p52 = scmp.eq.s32.totalorder %s30, 3
      %p53 = por %p51, %p52
      %p55 = scmp.ne.s32.totalorder %s38, %s54
      %p56 = scmp.eq.s32.totalorder %s30, 0
      %p57 = por %p55, %p56
      %s58 = ssub.s32 %s24, %s31
      %p59 = scmp.eq.s32.totalorder %s58, 0
      %s61 = sadd.s32 %s60, 1
      %s62 = scalar_select %p59, %s60, %s61
      %p65 = pneg %p59
      %p66 = scmp.eq.s32.totalorder %s24, 3
      %p67 = por %p65, %p66
      %p68 = scmp.ne.s32.totalorder %s60, %s63
      %p69 = scmp.eq.s32.totalorder %s24, 0
      %p70 = por %p68, %p69
      %p71 = scmp.ne.s32.totalorder %s60, %s63
      %p72 = scmp.eq.s32.totalorder %s29, 3
      %p73 = por %p71, %p72
      %p74 = scmp.ne.s32.totalorder %s63, %s64
      %p75 = scmp.eq.s32.totalorder %s29, 0
      %p76 = por %p74, %p75
      %p77 = scmp.ne.s32.totalorder %s63, %s64
      %p78 = scmp.eq.s32.totalorder %s30, 3
      %p79 = por %p77, %p78
      %p81 = scmp.ne.s32.totalorder %s64, %s80
      %p82 = scmp.eq.s32.totalorder %s30, 0
      %p83 = por %p81, %p82
      %s85 = sadd.s32 %s84, 1
      %p88 = scmp.eq.s32.totalorder %s24, 3
      %p89 = scmp.ne.s32.totalorder %s84, %s86
      %p90 = scmp.eq.s32.totalorder %s24, 0
      %p91 = por %p89, %p90
      %p92 = scmp.ne.s32.totalorder %s84, %s86
      %p93 = scmp.eq.s32.totalorder %s29, 3
      %p94 = por %p92, %p93
      %p95 = scmp.ne.s32.totalorder %s86, %s87
      %p96 = scmp.eq.s32.totalorder %s29, 0
      %p97 = por %p95, %p96
      %p98 = scmp.ne.s32.totalorder %s86, %s87
      %p99 = scmp.eq.s32.totalorder %s30, 3
      %p100 = por %p98, %p99
      %p102 = scmp.ne.s32.totalorder %s87, %s101
      %p103 = scmp.eq.s32.totalorder %s30, 0
      %p104 = por %p102, %p103
      %s105 = ssub.s32 %s24, %s31
      %p106 = scmp.eq.s32.totalorder %s105, 0
      %s108 = sadd.s32 %s107, 1
      %s109 = scalar_select %p106, %s107, %s108
      %p112 = pneg %p106
      %p113 = scmp.eq.s32.totalorder %s24, 3
      %p114 = por %p112, %p113
      %p115 = scmp.ne.s32.totalorder %s107, %s110
      %p116 = scmp.eq.s32.totalorder %s24, 0
      %p117 = por %p115, %p116
      %p118 = scmp.ne.s32.totalorder %s107, %s110
      %p119 = scmp.eq.s32.totalorder %s29, 3
      %p120 = por %p118, %p119
      %p121 = scmp.ne.s32.totalorder %s110, %s111
      %p122 = scmp.eq.s32.totalorder %s29, 0
      %p123 = por %p121, %p122
      %p124 = scmp.ne.s32.totalorder %s110, %s111
      %p125 = scmp.eq.s32.totalorder %s30, 3
      %p126 = por %p124, %p125
      %p128 = scmp.ne.s32.totalorder %s111, %s127
      %p129 = scmp.eq.s32.totalorder %s30, 0
      %p130 = por %p128, %p129
      %s131 = ssub.s32 %s24, %s31
      %p132 = scmp.eq.s32.totalorder %s131, 0
      %s134 = sadd.s32 %s133, 1
      %s135 = scalar_select %p132, %s133, %s134
      %p138 = pneg %p132
      %p139 = scmp.eq.s32.totalorder %s24, 3
      %p140 = por %p138, %p139
      %p141 = scmp.ne.s32.totalorder %s133, %s136
      %p142 = scmp.eq.s32.totalorder %s24, 0
      %p143 = por %p141, %p142
      %p144 = scmp.ne.s32.totalorder %s133, %s136
      %p145 = scmp.eq.s32.totalorder %s29, 3
      %p146 = por %p144, %p145
      %p147 = scmp.ne.s32.totalorder %s136, %s137
      %p148 = scmp.eq.s32.totalorder %s29, 0
      %p149 = por %p147, %p148
      %p150 = scmp.ne.s32.totalorder %s136, %s137
      %p151 = scmp.eq.s32.totalorder %s30, 3
      %p152 = por %p150, %p151
      %p154 = scmp.ne.s32.totalorder %s137, %s153
      %p155 = scmp.eq.s32.totalorder %s30, 0
      %p156 = por %p154, %p155
      %s158 = sadd.s32 %s157, 1
      %p161 = scmp.eq.s32.totalorder %s24, 3
      %p162 = scmp.ne.s32.totalorder %s157, %s159
      %p163 = scmp.eq.s32.totalorder %s24, 0
      %p164 = por %p162, %p163
      %p165 = scmp.ne.s32.totalorder %s157, %s159
      %p166 = scmp.eq.s32.totalorder %s29, 3
      %p167 = por %p165, %p166
      %p168 = scmp.ne.s32.totalorder %s159, %s160
      %p169 = scmp.eq.s32.totalorder %s29, 0
      %p170 = por %p168, %p169
      %p171 = scmp.ne.s32.totalorder %s159, %s160
      %p172 = scmp.eq.s32.totalorder %s30, 3
      %p173 = por %p171, %p172
      %p175 = scmp.ne.s32.totalorder %s160, %s174
      %p176 = scmp.eq.s32.totalorder %s30, 0
      %p177 = por %p175, %p176
      %s179 = sadd.s32 %s178, 1
      %p182 = scmp.eq.s32.totalorder %s24, 3
      %p183 = scmp.ne.s32.totalorder %s178, %s180
      %p184 = scmp.eq.s32.totalorder %s24, 0
      %p185 = por %p183, %p184
      %p186 = scmp.ne.s32.totalorder %s178, %s180
      %p187 = scmp.eq.s32.totalorder %s29, 3
      %p188 = por %p186, %p187
      %p189 = scmp.ne.s32.totalorder %s180, %s181
      %p190 = scmp.eq.s32.totalorder %s29, 0
      %p191 = por %p189, %p190
      %p192 = scmp.ne.s32.totalorder %s180, %s181
      %p193 = scmp.eq.s32.totalorder %s30, 3
      %p194 = por %p192, %p193
      %p196 = scmp.ne.s32.totalorder %s181, %s195
      %p197 = scmp.eq.s32.totalorder %s30, 0
      %p198 = por %p196, %p197
      %s200 = sadd.s32 %s199, 1
      %p203 = scmp.eq.s32.totalorder %s24, 3
      %p204 = scmp.ne.s32.totalorder %s199, %s201
      %p205 = scmp.eq.s32.totalorder %s24, 0
      %p206 = por %p204, %p205
      %p207 = scmp.ne.s32.totalorder %s199, %s201
      %p208 = scmp.eq.s32.totalorder %s29, 3
      %p209 = por %p207, %p208
      %p210 = scmp.ne.s32.totalorder %s201, %s202
      %p211 = scmp.eq.s32.totalorder %s29, 0
      %p212 = por %p210, %p211
      %p213 = scmp.ne.s32.totalorder %s201, %s202
      %p214 = scmp.eq.s32.totalorder %s30, 3
      %p215 = por %p213, %p214
      %p217 = scmp.ne.s32.totalorder %s202, %s216
      %p218 = scmp.eq.s32.totalorder %s30, 0
      %p219 = por %p217, %p218
      %p220 = scmp.le.s32.totalorder 1, %s24
      %p221 = scmp.lt.s32.totalorder %s24, 5
      %p222 = pnand %p220, %p221
      %p223 = pneg %p222
      // Predicated region
      $region9: #{tpu_custom_call.1} parent=5 // pred_check
        _
      $region10: #{tpu_custom_call.1} parent=5 // pred_check_branch
        %225 = sbr.rel (%p222) target = $region12
      $region11: #{tpu_custom_call.1} parent=5 // pred_region
        %s226 = ssub.s32 %s24, 1
        // Predicated region
        $region13: #{tpu_custom_call.1} parent=11 // pred_check
          %p227 = pneg %p97
        $region14: #{tpu_custom_call.1} parent=11 // pred_check_branch
          %229 = sbr.rel (%p227) target = $region16
        $region15: #{tpu_custom_call.1} parent=11 // pred_region
          _
        $region16: #{tpu_custom_call.1} parent=11 // pred_fallthru
          _
        // Predicated region
        $region17: #{tpu_custom_call.1} parent=11 // pred_check
          %p230 = pneg %p170
        $region18: #{tpu_custom_call.1} parent=11 // pred_check_branch
          %232 = sbr.rel (%p230) target = $region20
        $region19: #{tpu_custom_call.1} parent=11 // pred_region
          _
        $region20: #{tpu_custom_call.1} parent=11 // pred_fallthru
          _
      $region12: #{tpu_custom_call.1} parent=5 // pred_fallthru
        _
      %p233 = scmp.lt.s32.totalorder %s24, 4
      // Predicated region
      $region21: #{tpu_custom_call.1} parent=5 // pred_check
        %p234 = pneg %p233
      $region22: #{tpu_custom_call.1} parent=5 // pred_check_branch
        %236 = sbr.rel (%p234) target = $region24
      $region23: #{tpu_custom_call.1} parent=5 // pred_region
        // Predicated region
        $region25: #{tpu_custom_call.1} parent=23 // pred_check
          %p237 = pneg %p44
        $region26: #{tpu_custom_call.1} parent=23 // pred_check_branch
          %239 = sbr.rel (%p237) target = $region28
        $region27: #{tpu_custom_call.1} parent=23 // pred_region
          %s240 = sand.u32 %s34, 1
          %s241 = scalar_lea.sflag [#allocation5], %s240
          %s242 = sand.u32 %s34, 1
          %s243 = smul.addr %s242, 16
          %s244 = scalar_lea.vmem [#allocation4], %s243
          %s245 = smul.u32 2, %s24
          %s247 = ssub.s32 256, 256
          %248 = vsyncadd %s241, %s247
          %s249 = smul.addr %s245, 128
          %s250 = scalar_lea.hbm %s0, %s249
          %s252 = sshll.u32 %s244, 4
          %s253 = int_to_ptr.vmem [resolvable:$true] %s252
          %255 = dma.hbm_to_vmem [thread:$0]  %s250, 256, %s253, %s241
        $region28: #{tpu_custom_call.1} parent=23 // pred_fallthru
          _
        // Predicated region
        $region29: #{tpu_custom_call.1} parent=23 // pred_check
          %p256 = pneg %p70
        $region30: #{tpu_custom_call.1} parent=23 // pred_check_branch
          %258 = sbr.rel (%p256) target = $region32
        $region31: #{tpu_custom_call.1} parent=23 // pred_region
          %s259 = sand.u32 %s24, 1
          %s260 = scalar_lea.sflag [#allocation8], %s259
          %s261 = sand.u32 %s60, 1
          %s262 = smul.addr %s261, 256
          %s263 = scalar_lea.vmem [#allocation7], %s262
          %s264 = smul.u32 32, %s24
          %s266 = ssub.s32 4096, 4096
          %267 = vsyncadd %s260, %s266
          %s268 = smul.addr %s264, 128
          %s269 = scalar_lea.hbm %s1, %s268
          %s270 = sshll.u32 %s263, 4
          %s271 = int_to_ptr.vmem [resolvable:$true] %s270
          %276 = dma.hbm_to_vmem [thread:$0]  %s269, 4096, %s271, %s260, 128, 128, 8
        $region32: #{tpu_custom_call.1} parent=23 // pred_fallthru
          _
        // Predicated region
        $region33: #{tpu_custom_call.1} parent=23 // pred_check
          %p277 = pneg %p117
        $region34: #{tpu_custom_call.1} parent=23 // pred_check_branch
          %279 = sbr.rel (%p277) target = $region36
        $region35: #{tpu_custom_call.1} parent=23 // pred_region
          %s280 = sand.u32 %s24, 1
          %s281 = scalar_lea.sflag [#allocation8], %s280
          %s282 = sand.u32 %s107, 1
          %s283 = smul.addr %s282, 16
          %s284 = scalar_lea.vmem [#allocation9], %s283
          %s285 = smul.u32 2, %s24
          %s287 = ssub.s32 256, 256
          %288 = vsyncadd %s281, %s287
          %s289 = smul.addr %s285, 128
          %s290 = scalar_lea.hbm %s3, %s289
          %s292 = sshll.u32 %s284, 4
          %s293 = int_to_ptr.vmem [resolvable:$true] %s292
          %295 = dma.hbm_to_vmem [thread:$0]  %s290, 256, %s293, %s281
        $region36: #{tpu_custom_call.1} parent=23 // pred_fallthru
          _
        // Predicated region
        $region37: #{tpu_custom_call.1} parent=23 // pred_check
          %p296 = pneg %p143
        $region38: #{tpu_custom_call.1} parent=23 // pred_check_branch
          %298 = sbr.rel (%p296) target = $region40
        $region39: #{tpu_custom_call.1} parent=23 // pred_region
          %s299 = sand.u32 %s133, 1
          %s300 = scalar_lea.sflag [#allocation11], %s299
          %s301 = sand.u32 %s133, 1
          %s302 = smul.addr %s301, 256
          %s303 = scalar_lea.vmem [#allocation10], %s302
          %s304 = smul.u32 32, %s24
          %s306 = ssub.s32 4096, 4096
          %307 = vsyncadd %s300, %s306
          %s308 = smul.addr %s304, 128
          %s309 = scalar_lea.hbm %s4, %s308
          %s310 = sshll.u32 %s303, 4
          %s311 = int_to_ptr.vmem [resolvable:$true] %s310
          %316 = dma.hbm_to_vmem [thread:$0]  %s309, 4096, %s311, %s300, 128, 128, 8
        $region40: #{tpu_custom_call.1} parent=23 // pred_fallthru
          _
      $region24: #{tpu_custom_call.1} parent=5 // pred_fallthru
        _
      %p317 = scmp.le.s32.totalorder 1, %s24
      %p318 = scmp.lt.s32.totalorder %s24, 5
      %p319 = pnand %p317, %p318
      %p320 = pneg %p319
      // Predicated region
      $region41: #{tpu_custom_call.1} parent=5 // pred_check
        _
      $region42: #{tpu_custom_call.1} parent=5 // pred_check_branch
        %322 = sbr.rel (%p319) target = $region44
      $region43: #{tpu_custom_call.1} parent=5 // pred_region
        %s323 = ssub.s32 %s24, 1
        %s324 = sand.u32 %s37, 1
        %s325 = scalar_lea.sflag [#allocation5], %s324
        %s326 = sand.u32 %s37, 1
        %s327 = smul.addr %s326, 16
        %s328 = scalar_lea.vmem [#allocation4], %s327
        // Predicated region
        $region45: #{tpu_custom_call.1} parent=43 // pred_check
          %p329 = pneg %p50
        $region46: #{tpu_custom_call.1} parent=43 // pred_check_branch
          %331 = sbr.rel (%p329) target = $region48
        $region47: #{tpu_custom_call.1} parent=43 // pred_region
          %332 = dma.done %s325, 256
        $region48: #{tpu_custom_call.1} parent=43 // pred_fallthru
          _
        %s333 = sand.u32 %s29, 1
        %s334 = scalar_lea.sflag [#allocation8], %s333
        %s335 = sand.u32 %s63, 1
        %s336 = smul.addr %s335, 256
        %s337 = scalar_lea.vmem [#allocation7], %s336
        // Predicated region
        $region49: #{tpu_custom_call.1} parent=43 // pred_check
          %p338 = pneg %p76
        $region50: #{tpu_custom_call.1} parent=43 // pred_check_branch
          %340 = sbr.rel (%p338) target = $region52
        $region51: #{tpu_custom_call.1} parent=43 // pred_region
          %341 = dma.done %s334, 4096
        $region52: #{tpu_custom_call.1} parent=43 // pred_fallthru
          _
        %s342 = sand.u32 %s29, 1
        %s343 = scalar_lea.sflag [#allocation8], %s342
        %s344 = sand.u32 %s110, 1
        %s345 = smul.addr %s344, 16
        %s346 = scalar_lea.vmem [#allocation9], %s345
        // Predicated region
        $region53: #{tpu_custom_call.1} parent=43 // pred_check
          %p347 = pneg %p123
        $region54: #{tpu_custom_call.1} parent=43 // pred_check_branch
          %349 = sbr.rel (%p347) target = $region56
        $region55: #{tpu_custom_call.1} parent=43 // pred_region
          %350 = dma.done %s343, 256
        $region56: #{tpu_custom_call.1} parent=43 // pred_fallthru
          _
        %s351 = sand.u32 %s136, 1
        %s352 = scalar_lea.sflag [#allocation11], %s351
        %s353 = sand.u32 %s136, 1
        %s354 = smul.addr %s353, 256
        %s355 = scalar_lea.vmem [#allocation10], %s354
        // Predicated region
        $region57: #{tpu_custom_call.1} parent=43 // pred_check
          %p356 = pneg %p149
        $region58: #{tpu_custom_call.1} parent=43 // pred_check_branch
          %358 = sbr.rel (%p356) target = $region60
        $region59: #{tpu_custom_call.1} parent=43 // pred_region
          %359 = dma.done %s352, 4096
        $region60: #{tpu_custom_call.1} parent=43 // pred_fallthru
          _
        %s360 = sand.u32 %s37, 1
        %s361 = scalar_lea.sflag [#allocation5], %s360
        %s362 = sand.u32 %s37, 1
        %s363 = smul.addr %s362, 16
        %s364 = scalar_lea.vmem [#allocation4], %s363
        %p365 = pneg %p50
        %p366 = pneg %p47
        %s367 = sand.u32 %s29, 1
        %s368 = scalar_lea.sflag [#allocation8], %s367
        %s369 = sand.u32 %s63, 1
        %s370 = smul.addr %s369, 256
        %s371 = scalar_lea.vmem [#allocation7], %s370
        %p372 = pneg %p76
        %p373 = pneg %p73
        %p374 = pneg %p97
        %p375 = pneg %p94
        %s376 = sand.u32 %s29, 1
        %s377 = scalar_lea.sflag [#allocation8], %s376
        %s378 = sand.u32 %s110, 1
        %s379 = smul.addr %s378, 16
        %s380 = scalar_lea.vmem [#allocation9], %s379
        %p381 = pneg %p123
        %p382 = pneg %p120
        %s383 = sand.u32 %s136, 1
        %s384 = scalar_lea.sflag [#allocation11], %s383
        %s385 = sand.u32 %s136, 1
        %s386 = smul.addr %s385, 256
        %s387 = scalar_lea.vmem [#allocation10], %s386
        %p388 = pneg %p149
        %p389 = pneg %p146
        %p390 = pneg %p170
        %p391 = pneg %p167
        %p392 = pneg %p191
        %p393 = pneg %p188
        %p394 = pneg %p212
        %p395 = pneg %p209
        %s396 = smul.u32 2, %s29
        %s397 = smul.u32 32, %s29
        %s398 = smul.u32 2, %s29
        %s399 = smul.u32 32, %s29
        %p401 = scmp.eq.s32.totalorder %s29, 0
        // Predicated region
        $region61: #{tpu_custom_call.1} parent=43 // pred_check
          %p402 = pneg %p401
        $region62: #{tpu_custom_call.1} parent=43 // pred_check_branch
          %404 = sbr.rel (%p402) target = $region64
        $region63: #{tpu_custom_call.1} parent=43 // pred_region
          %405 = vst [vmem:[#allocation2] sm:$0xff] 0.0
          %406 = vst [vmem:[#allocation3] sm:$0xff] 0.0
        $region64: #{tpu_custom_call.1} parent=43 // pred_fallthru
          _
        %v407 = vld [vmem:[#allocation2] sm:$0xff]
        %v408 = vld [vmem:[%s328] sm:$0xff]
        %v409 = vld [vmem:[%s328 + $0x8] sm:$0xff]
        %v410 = vpack.c.bf16 %v408, %v408
        %v411 = vpack.c.bf16 %v409, %v409
        %v412 = vld [vmem:[%s337] sm:$0xff]
        %v413 = vld [vmem:[%s337 + $0x8] sm:$0xff]
        %v414 = vld [vmem:[%s337 + $0x10] sm:$0xff]
        %v415 = vld [vmem:[%s337 + $0x18] sm:$0xff]
        %v416 = vld [vmem:[%s337 + $0x20] sm:$0xff]
        %v417 = vld [vmem:[%s337 + $0x28] sm:$0xff]
        %v418 = vld [vmem:[%s337 + $0x30] sm:$0xff]
        %v419 = vld [vmem:[%s337 + $0x38] sm:$0xff]
        %v420 = vld [vmem:[%s337 + $0x40] sm:$0xff]
        %v421 = vld [vmem:[%s337 + $0x48] sm:$0xff]
        %v422 = vld [vmem:[%s337 + $0x50] sm:$0xff]
        %v423 = vld [vmem:[%s337 + $0x58] sm:$0xff]
        %v424 = vld [vmem:[%s337 + $0x60] sm:$0xff]
        %v425 = vld [vmem:[%s337 + $0x68] sm:$0xff]
        %v426 = vld [vmem:[%s337 + $0x70] sm:$0xff]
        %v427 = vld [vmem:[%s337 + $0x78] sm:$0xff]
        %v428 = vld [vmem:[%s337 + $0x80] sm:$0xff]
        %v429 = vld [vmem:[%s337 + $0x88] sm:$0xff]
        %v430 = vld [vmem:[%s337 + $0x90] sm:$0xff]
        %v431 = vld [vmem:[%s337 + $0x98] sm:$0xff]
        %v432 = vld [vmem:[%s337 + $0xa0] sm:$0xff]
        %v433 = vld [vmem:[%s337 + $0xa8] sm:$0xff]
        %v434 = vld [vmem:[%s337 + $0xb0] sm:$0xff]
        %v435 = vld [vmem:[%s337 + $0xb8] sm:$0xff]
        %v436 = vld [vmem:[%s337 + $0xc0] sm:$0xff]
        %v437 = vld [vmem:[%s337 + $0xc8] sm:$0xff]
        %v438 = vld [vmem:[%s337 + $0xd0] sm:$0xff]
        %v439 = vld [vmem:[%s337 + $0xd8] sm:$0xff]
        %v440 = vld [vmem:[%s337 + $0xe0] sm:$0xff]
        %v441 = vld [vmem:[%s337 + $0xe8] sm:$0xff]
        %v442 = vld [vmem:[%s337 + $0xf0] sm:$0xff]
        %v443 = vld [vmem:[%s337 + $0xf8] sm:$0xff]
        %v444 = vpack.c.bf16 %v413, %v412
        %v445 = vpack.c.bf16 %v415, %v414
        %v446 = vpack.c.bf16 %v417, %v416
        %v447 = vpack.c.bf16 %v419, %v418
        %v448 = vpack.c.bf16 %v421, %v420
        %v449 = vpack.c.bf16 %v423, %v422
        %v450 = vpack.c.bf16 %v425, %v424
        %v451 = vpack.c.bf16 %v427, %v426
        %v452 = vpack.c.bf16 %v429, %v428
        %v453 = vpack.c.bf16 %v431, %v430
        %v454 = vpack.c.bf16 %v433, %v432
        %v455 = vpack.c.bf16 %v435, %v434
        %v456 = vpack.c.bf16 %v437, %v436
        %v457 = vpack.c.bf16 %v439, %v438
        %v458 = vpack.c.bf16 %v441, %v440
        %v459 = vpack.c.bf16 %v443, %v442
        %460 = vmatprep.subr.bf16.mxu0 0
        %461 = vmatpush1.bf16.msra.mxu0 %v444
        %462 = vmatprep.subr.bf16.mxu0 0
        %463 = vmatpush1.bf16.msra.mxu0 %v445
        %464 = vmatprep.subr.bf16.mxu0 0
        %465 = vmatpush1.bf16.msra.mxu0 %v446
        %466 = vmatprep.subr.bf16.mxu0 0
        %467 = vmatpush1.bf16.msra.mxu0 %v447
        %468 = vmatprep.subr.bf16.mxu0 0
        %469 = vmatpush1.bf16.msra.mxu0 %v448
        %470 = vmatprep.subr.bf16.mxu0 0
        %471 = vmatpush1.bf16.msra.mxu0 %v449
        %472 = vmatprep.subr.bf16.mxu0 0
        %473 = vmatpush1.bf16.msra.mxu0 %v450
        %474 = vmatprep.subr.bf16.mxu0 0
        %475 = vmatpush1.bf16.msra.mxu0 %v451
        %476 = vmatprep.subr.bf16.mxu0 0
        %477 = vmatpush1.bf16.msra.mxu0 %v452
        %478 = vmatprep.subr.bf16.mxu0 0
        %479 = vmatpush1.bf16.msra.mxu0 %v453
        %480 = vmatprep.subr.bf16.mxu0 0
        %481 = vmatpush1.bf16.msra.mxu0 %v454
        %482 = vmatprep.subr.bf16.mxu0 0
        %483 = vmatpush1.bf16.msra.mxu0 %v455
        %484 = vmatprep.subr.bf16.mxu0 0
        %485 = vmatpush1.bf16.msra.mxu0 %v456
        %486 = vmatprep.subr.bf16.mxu0 0
        %487 = vmatpush1.bf16.msra.mxu0 %v457
        %488 = vmatprep.subr.bf16.mxu0 0
        %489 = vmatpush1.bf16.msra.mxu0 %v458
        %490 = vmatprep.subr.bf16.mxu0 0
        %491 = vmatpush1.bf16.msra.mxu0 %v459
        %492 = vmatprep.mubr.bf16.mxu0 %v411
        %493 = vmatmul.mubr.bf16.gmra.mrb[0].mxu0 %v410
        %v494 = vpop.f32.mrb[0].mxu0
        %v495 = vadd.f32 0.0, %v494
        %v496 = vpop.f32.mrb[0].mxu0
        %v497 = vpop.f32.mrb[0].mxu0
        %v498 = vpop.f32.mrb[0].mxu0
        %499 = vdwg.mxu0
        %v500 = vadd.f32 %v407, %v495
        %501 = vst [vmem:[#allocation2] sm:$0xff] %v500
        %v502 = vld [vmem:[#allocation3] sm:$0xff]
        %v503 = vld [vmem:[%s346] sm:$0xff]
        %v504 = vld [vmem:[%s346 + $0x8] sm:$0xff]
        %v505 = vpack.c.bf16 %v503, %v503
        %v506 = vpack.c.bf16 %v504, %v504
        %v507 = vld [vmem:[%s355] sm:$0xff]
        %v508 = vld [vmem:[%s355 + $0x8] sm:$0xff]
        %v509 = vld [vmem:[%s355 + $0x10] sm:$0xff]
        %v510 = vld [vmem:[%s355 + $0x18] sm:$0xff]
        %v511 = vld [vmem:[%s355 + $0x20] sm:$0xff]
        %v512 = vld [vmem:[%s355 + $0x28] sm:$0xff]
        %v513 = vld [vmem:[%s355 + $0x30] sm:$0xff]
        %v514 = vld [vmem:[%s355 + $0x38] sm:$0xff]
        %v515 = vld [vmem:[%s355 + $0x40] sm:$0xff]
        %v516 = vld [vmem:[%s355 + $0x48] sm:$0xff]
        %v517 = vld [vmem:[%s355 + $0x50] sm:$0xff]
        %v518 = vld [vmem:[%s355 + $0x58] sm:$0xff]
        %v519 = vld [vmem:[%s355 + $0x60] sm:$0xff]
        %v520 = vld [vmem:[%s355 + $0x68] sm:$0xff]
        %v521 = vld [vmem:[%s355 + $0x70] sm:$0xff]
        %v522 = vld [vmem:[%s355 + $0x78] sm:$0xff]
        %v523 = vld [vmem:[%s355 + $0x80] sm:$0xff]
        %v524 = vld [vmem:[%s355 + $0x88] sm:$0xff]
        %v525 = vld [vmem:[%s355 + $0x90] sm:$0xff]
        %v526 = vld [vmem:[%s355 + $0x98] sm:$0xff]
        %v527 = vld [vmem:[%s355 + $0xa0] sm:$0xff]
        %v528 = vld [vmem:[%s355 + $0xa8] sm:$0xff]
        %v529 = vld [vmem:[%s355 + $0xb0] sm:$0xff]
        %v530 = vld [vmem:[%s355 + $0xb8] sm:$0xff]
        %v531 = vld [vmem:[%s355 + $0xc0] sm:$0xff]
        %v532 = vld [vmem:[%s355 + $0xc8] sm:$0xff]
        %v533 = vld [vmem:[%s355 + $0xd0] sm:$0xff]
        %v534 = vld [vmem:[%s355 + $0xd8] sm:$0xff]
        %v535 = vld [vmem:[%s355 + $0xe0] sm:$0xff]
        %v536 = vld [vmem:[%s355 + $0xe8] sm:$0xff]
        %v537 = vld [vmem:[%s355 + $0xf0] sm:$0xff]
        %v538 = vld [vmem:[%s355 + $0xf8] sm:$0xff]
        %v539 = vpack.c.bf16 %v508, %v507
        %v540 = vpack.c.bf16 %v510, %v509
        %v541 = vpack.c.bf16 %v512, %v511
        %v542 = vpack.c.bf16 %v514, %v513
        %v543 = vpack.c.bf16 %v516, %v515
        %v544 = vpack.c.bf16 %v518, %v517
        %v545 = vpack.c.bf16 %v520, %v519
        %v546 = vpack.c.bf16 %v522, %v521
        %v547 = vpack.c.bf16 %v524, %v523
        %v548 = vpack.c.bf16 %v526, %v525
        %v549 = vpack.c.bf16 %v528, %v527
        %v550 = vpack.c.bf16 %v530, %v529
        %v551 = vpack.c.bf16 %v532, %v531
        %v552 = vpack.c.bf16 %v534, %v533
        %v553 = vpack.c.bf16 %v536, %v535
        %v554 = vpack.c.bf16 %v538, %v537
        %555 = vmatprep.subr.bf16.mxu0 0
        %556 = vmatpush1.bf16.msra.mxu0 %v539
        %557 = vmatprep.subr.bf16.mxu0 0
        %558 = vmatpush1.bf16.msra.mxu0 %v540
        %559 = vmatprep.subr.bf16.mxu0 0
        %560 = vmatpush1.bf16.msra.mxu0 %v541
        %561 = vmatprep.subr.bf16.mxu0 0
        %562 = vmatpush1.bf16.msra.mxu0 %v542
        %563 = vmatprep.subr.bf16.mxu0 0
        %564 = vmatpush1.bf16.msra.mxu0 %v543
        %565 = vmatprep.subr.bf16.mxu0 0
        %566 = vmatpush1.bf16.msra.mxu0 %v544
        %567 = vmatprep.subr.bf16.mxu0 0
        %568 = vmatpush1.bf16.msra.mxu0 %v545
        %569 = vmatprep.subr.bf16.mxu0 0
        %570 = vmatpush1.bf16.msra.mxu0 %v546
        %571 = vmatprep.subr.bf16.mxu0 0
        %572 = vmatpush1.bf16.msra.mxu0 %v547
        %573 = vmatprep.subr.bf16.mxu0 0
        %574 = vmatpush1.bf16.msra.mxu0 %v548
        %575 = vmatprep.subr.bf16.mxu0 0
        %576 = vmatpush1.bf16.msra.mxu0 %v549
        %577 = vmatprep.subr.bf16.mxu0 0
        %578 = vmatpush1.bf16.msra.mxu0 %v550
        %579 = vmatprep.subr.bf16.mxu0 0
        %580 = vmatpush1.bf16.msra.mxu0 %v551
        %581 = vmatprep.subr.bf16.mxu0 0
        %582 = vmatpush1.bf16.msra.mxu0 %v552
        %583 = vmatprep.subr.bf16.mxu0 0
        %584 = vmatpush1.bf16.msra.mxu0 %v553
        %585 = vmatprep.subr.bf16.mxu0 0
        %586 = vmatpush1.bf16.msra.mxu0 %v554
        %587 = vmatprep.mubr.bf16.mxu0 %v506
        %588 = vmatmul.mubr.bf16.gmra.mrb[0].mxu0 %v505
        %v589 = vpop.f32.mrb[0].mxu0
        %v590 = vadd.f32 0.0, %v589
        %v591 = vpop.f32.mrb[0].mxu0
        %v592 = vpop.f32.mrb[0].mxu0
        %v593 = vpop.f32.mrb[0].mxu0
        %594 = vdwg.mxu0
        %v595 = vadd.f32 %v502, %v590
        %596 = vst [vmem:[#allocation3] sm:$0xff] %v595
        %p597 = scmp.eq.s32.totalorder %s29, 3
        // Predicated region
        $region65: #{tpu_custom_call.1} parent=43 // pred_check
          %p598 = pneg %p597
        $region66: #{tpu_custom_call.1} parent=43 // pred_check_branch
          %600 = sbr.rel (%p598) target = $region68
        $region67: #{tpu_custom_call.1} parent=43 // pred_region
          %v601 = vld [vmem:[#allocation2] sm:$0xff]
          %v602 = vld [vmem:[%s2] sm:$0x1]
          %v604 = vlaneseq
          %v605 = vshrl.u32 %v604, 7
          %v606 = vsub.s32 0, %v605
          %v607 = vrot.slane %v602, %v606
          %v609 = vadd.f32 %v601, %v607
          %v610 = vmul.f32 %v609, %v609
          %611 = vadd.xlane.f32.xlu0 %v610
          %v612 = vpop.xlane.xlu0 %611
          %v613 = vrsqrt.pop %v612
          %v614 = vmul.f32 %v609, %v613
          %v615 = vld [vmem:[#allocation3] sm:$0xff]
          %v616 = vld [vmem:[%s5] sm:$0x1]
          %v618 = vlaneseq
          %v619 = vshrl.u32 %v618, 7
          %v620 = vsub.s32 0, %v619
          %v621 = vrot.slane %v616, %v620
          %v623 = vadd.f32 %v615, %v621
          %v624 = vmul.f32 %v623, %v623
          %625 = vadd.xlane.f32.xlu0 %v624
          %v626 = vpop.xlane.xlu0 %625
          %v627 = vrsqrt.pop %v626
          %v628 = vmul.f32 %v623, %v627
          %v629 = vpack.c.bf16 %v614, %v614
          %630 = vst [vmem:[#allocation12] sm:$0xf] %v629
          %v631 = vmul.f32 %v614, %v628
          %632 = vadd.xlane.f32.xlu0 %v631
          %v633 = vpop.xlane.xlu0 %632
          %v634 = vmul.f32 %v633, 14.285714
          %vm635 = vcmask 7168
          %636 = vst.msk [vmem:[%s7] sm:$0xff] %vm635, %v634
        $region68: #{tpu_custom_call.1} parent=43 // pred_fallthru
          _
        // Predicated region
        $region69: #{tpu_custom_call.1} parent=43 // pred_check
          %p637 = pneg %p188
        $region70: #{tpu_custom_call.1} parent=43 // pred_check_branch
          %639 = sbr.rel (%p637) target = $region72
        $region71: #{tpu_custom_call.1} parent=43 // pred_region
          %s641 = ssub.s32 64, 64
          %642 = vsyncadd [#allocation6], %s641
          %s644 = sshll.u32 [#allocation12], 4
          %s645 = int_to_ptr.vmem [resolvable:$true] %s644
          %647 = dma.vmem_to_hbm [thread:$0]  %s645, 64, %s6, [#allocation6]
        $region72: #{tpu_custom_call.1} parent=43 // pred_fallthru
          _
        // Predicated region
        $region73: #{tpu_custom_call.1} parent=43 // pred_check
          %p648 = pneg %p209
        $region74: #{tpu_custom_call.1} parent=43 // pred_check_branch
          %650 = sbr.rel (%p648) target = $region76
        $region75: #{tpu_custom_call.1} parent=43 // pred_region
          _
        $region76: #{tpu_custom_call.1} parent=43 // pred_fallthru
          _
        // Predicated region
        $region77: #{tpu_custom_call.1} parent=43 // pred_check
          %p651 = pneg %p188
        $region78: #{tpu_custom_call.1} parent=43 // pred_check_branch
          %653 = sbr.rel (%p651) target = $region80
        $region79: #{tpu_custom_call.1} parent=43 // pred_region
          %654 = dma.done [#allocation6], 64
        $region80: #{tpu_custom_call.1} parent=43 // pred_fallthru
          _
        // Predicated region
        $region81: #{tpu_custom_call.1} parent=43 // pred_check
          %p655 = pneg %p209
        $region82: #{tpu_custom_call.1} parent=43 // pred_check_branch
          %657 = sbr.rel (%p655) target = $region84
        $region83: #{tpu_custom_call.1} parent=43 // pred_region
          _
        $region84: #{tpu_custom_call.1} parent=43 // pred_fallthru
          _
      $region44: #{tpu_custom_call.1} parent=5 // pred_fallthru
        _
      %p658 = scmp.le.s32.totalorder 2, %s24
      // Predicated region
      $region85: #{tpu_custom_call.1} parent=5 // pred_check
        %p659 = pneg %p658
      $region86: #{tpu_custom_call.1} parent=5 // pred_check_branch
        %661 = sbr.rel (%p659) target = $region88
      $region87: #{tpu_custom_call.1} parent=5 // pred_region
        %s662 = ssub.s32 %s24, 2
      $region88: #{tpu_custom_call.1} parent=5 // pred_fallthru
        _
    $region6: #{tpu_custom_call.1} parent=1 // loop_footer
      %s28 = sadd.s32 1, %s24
    $region7: #{tpu_custom_call.1} parent=1 // loop_footer_branch
      %23 = sbr.rel target = $region3
    $region8: #{tpu_custom_call.1} parent=1 // loop_exit
      _
    %663 = vsyncpa [#allocation5], 1
    %s664 = scalar_lea.sflag [#allocation5], 1
    %665 = vsyncpa %s664, 1
    %666 = vsyncpa [#allocation8], 1
    %s667 = scalar_lea.sflag [#allocation8], 1
    %668 = vsyncpa %s667, 1
    %669 = vsyncpa [#allocation11], 1
    %s670 = scalar_lea.sflag [#allocation11], 1
    %671 = vsyncpa %s670, 1
    %672 = vsyncpa [#allocation6], 1
    %s673 = scalar_lea.sflag [#allocation6], 1
    %674 = vsyncpa %s673, 1

</llo_original>
